<compile_context>
chip_gen: v7x
topology: tpu7x:2x2x1
jax: 0.10.0
libtpu: 0.0.40
codegen_flags: <defaults>
</compile_context>

<pallas_src>
import functools
import math

import jax
import jax.numpy as jnp
from jax.experimental import pallas as pl
from jax.experimental.pallas import tpu as pltpu


def _modulated_1d_kernel(x_ref, lat_ref, w_ref, b_ref, o_ref, *, scale, normalize_mlp):
    # x_ref:   (Bt, C)   features to modulate
    # lat_ref: (Bt, L)   latent codes
    # w_ref:   (L, C)    un-scaled EqualLinear weight, transposed to (in, out)
    # b_ref:   (1, C)    bias
    # o_ref:   (Bt, C)   output
    # Fold the equalized-LR scale onto the small latent operand (Bt*L elements,
    # ~4x fewer multiplies than scaling the (Bt, C) accumulator).
    lat = lat_ref[...].astype(jnp.float32) * scale
    w = w_ref[...].astype(jnp.float32)

    # EqualLinear: single MXU matmul per tile, f32 accumulation.
    s_lin = jnp.dot(lat, w, preferred_element_type=jnp.float32,
                    precision=jax.lax.Precision.HIGHEST)
    s_lin = s_lin + b_ref[...].astype(jnp.float32)

    if normalize_mlp:
        # PixelNorm over the channel dim: v / sqrt(mean(v^2, dim=1) + 1e-5)
        mean_sq = jnp.mean(s_lin * s_lin, axis=-1, keepdims=True)
        s_lin = s_lin * jax.lax.rsqrt(mean_sq + 1e-5)

    s = 1.0 + s_lin                                   # modulation scale
    y = x_ref[...].astype(jnp.float32) * s            # x * s

    # d = rsqrt(sum(x^2, dim=1) + 1e-5); row-reduce (XLU slot) + rsqrt (EUP slot)
    ssq = jnp.sum(y * y, axis=-1, keepdims=True)
    d = jax.lax.rsqrt(ssq + 1e-5)

    o_ref[...] = (y * d).astype(o_ref.dtype)


def _round_up(n, m):
    return ((n + m - 1) // m) * m


def modulated_1d(x, latent, weight_orig, bias, *, normalize_mlp=False, block_b=None):
    """Modulated_1D forward.

    x:           [B, in_channel]
    latent:      [B, latent_dim]
    weight_orig: [in_channel, latent_dim]   (nn.Linear weight, pre EqualLR scaling)
    bias:        [in_channel]
    """
    B, C = x.shape
    B2, L = latent.shape
    Cw, Lw = weight_orig.shape
    assert B == B2 and C == Cw and L == Lw

    # EqualLR fan_in for nn.Linear(latent_dim, in_channel) is latent_dim.
    scale = math.sqrt(2.0 / L)

    # Layout glue: weight as (L, C) so the matmul output has C on the lane axis.
    w_io = jnp.transpose(weight_orig)          # (L, C)
    b2 = bias.reshape(1, C)

    # Batch tile: capped (does not scale with B), multiple of 8 sublanes.
    #   * small B  -> one grid step (no pointless split on single-TC v5e/v6e)
    #   * large B  -> many 512-row steps (pipeline depth + v7x dual-TC sharing,
    #     VMEM per buffer ~= 512*C*4 bytes, far under every generation's budget)
    MAX_BLOCK_B = 512
    if block_b is None:
        block_b = min(_round_up(B, 8), MAX_BLOCK_B)
    else:
        block_b = min(_round_up(block_b, 8), _round_up(B, 8))

    # Ragged batches: zero-pad rows to a multiple of block_b (padded rows produce
    # finite garbage that is sliced away; rsqrt(0 + 1e-5) is well defined).
    B_pad = _round_up(B, block_b)
    if B_pad != B:
        pad = B_pad - B
        x_in = jnp.pad(x, ((0, pad), (0, 0)))
        lat_in = jnp.pad(latent, ((0, pad), (0, 0)))
    else:
        x_in, lat_in = x, latent
    num_blocks = B_pad // block_b

    kernel = functools.partial(_modulated_1d_kernel,
                               scale=scale, normalize_mlp=normalize_mlp)

    itemsize = jnp.dtype(x.dtype).itemsize
    cost = pl.CostEstimate(
        flops=2 * B_pad * L * C + 4 * B_pad * C,
        transcendentals=B_pad * (2 if normalize_mlp else 1),
        bytes_accessed=itemsize * (2 * B_pad * C + B_pad * L) + 4 * (L * C + C),
    )

    out = pl.pallas_call(
        kernel,
        out_shape=jax.ShapeDtypeStruct((B_pad, C), x.dtype),
        grid_spec=pltpu.PrefetchScalarGridSpec(
            num_scalar_prefetch=0,
            grid=(num_blocks,),
            in_specs=[
                pl.BlockSpec((block_b, C), lambda i: (i, 0)),   # x
                pl.BlockSpec((block_b, L), lambda i: (i, 0)),   # latent
                pl.BlockSpec((L, C), lambda i: (0, 0)),         # weight (resident)
                pl.BlockSpec((1, C), lambda i: (0, 0)),         # bias   (resident)
            ],
            out_specs=pl.BlockSpec((block_b, C), lambda i: (i, 0)),
        ),
        compiler_params=pltpu.CompilerParams(
            dimension_semantics=("parallel",)),
        cost_estimate=cost,
    )(x_in, lat_in, w_io, b2)

    if B_pad != B:
        out = out[:B]
    return out


def _reference(x, latent, weight_orig, bias, normalize_mlp=False):
    scale = math.sqrt(2.0 / latent.shape[1])
    s_lin = (latent.astype(jnp.float32) @ (weight_orig.astype(jnp.float32) * scale).T
             + bias.reshape(1, -1).astype(jnp.float32))
    if normalize_mlp:
        s_lin = s_lin / jnp.sqrt(jnp.mean(s_lin ** 2, axis=1, keepdims=True) + 1e-5)
    s = 1.0 + s_lin
    y = x.astype(jnp.float32) * s
    d = jax.lax.rsqrt(jnp.sum(y ** 2, axis=1, keepdims=True) + 1e-5)
    return (y * d).astype(x.dtype)


if __name__ == "__main__":
    # Modulated_1D(in_channel=128, latent_dim=32).
    # C=128 keeps the output lane-dense (full unmasked vst per row of vregs).
    C, L = 128, 32

    key = jax.random.PRNGKey(0)
    kx, kl, kw = jax.random.split(key, 3)

    ok = True
    # B=16: small batch -> single grid step.  B=10: ragged batch -> padded to 16.
    for B in (16, 10):
        x = jax.random.normal(kx, (B, C), dtype=jnp.float32)
        latent = jax.random.normal(kl, (B, L), dtype=jnp.float32)
        # linear.weight.data.normal_() ; linear.bias.data.zero_()
        weight_orig = jax.random.normal(kw, (C, L), dtype=jnp.float32)
        bias = jnp.zeros((C,), dtype=jnp.float32)

        for nm in (False, True):   # default path and the normalize_mlp=True variant
            out = modulated_1d(x, latent, weight_orig, bias, normalize_mlp=nm)
            out = jax.block_until_ready(out)
            ref = _reference(x, latent, weight_orig, bias, normalize_mlp=nm)
            ok = ok and (out.shape == (B, C)) and bool(
                jnp.allclose(out, ref, atol=1e-4, rtol=1e-4))

    assert ok
    print("KERNEL_OK")
</pallas_src>

<mosaic_0001>
module attributes {stable_mosaic.version = 11 : i64} {
  func.func @_modulated_1d_kernel(%arg0: i32, %arg1: memref<16x128xf32, #tpu.memory_space<vmem>>, %arg2: memref<16x32xf32, #tpu.memory_space<vmem>>, %arg3: memref<32x128xf32, #tpu.memory_space<vmem>>, %arg4: memref<1x128xf32, #tpu.memory_space<vmem>>, %arg5: memref<16x128xf32, #tpu.memory_space<vmem>>) attributes {dimension_semantics = [#tpu.dimension_semantics<parallel>], iteration_bounds = array<i64: 1>, scalar_prefetch = 0 : i64, scratch_operands = 0 : i64, tpu.core_type = #tpu.core_type<tc>, window_params = [{transform_indices = @transform_0, window_bounds = array<i64: 16, 128>}, {transform_indices = @transform_1, window_bounds = array<i64: 16, 32>}, {pipeline_mode = #tpu.pipeline_mode<synchronous>, transform_indices = @transform_2, window_bounds = array<i64: 32, 128>}, {pipeline_mode = #tpu.pipeline_mode<synchronous>, transform_indices = @transform_3, window_bounds = array<i64: 1, 128>}, {transform_indices = @transform_4, window_bounds = array<i64: 16, 128>}]} {
    %c0 = arith.constant 0 : index
    %c0_0 = arith.constant 0 : index
    %0 = vector.load %arg2[%c0, %c0_0] : memref<16x32xf32, #tpu.memory_space<vmem>>, vector<16x32xf32>
    %cst = arith.constant 2.500000e-01 : f32
    %1 = vector.broadcast %cst : f32 to vector<16x32xf32>
    %2 = arith.mulf %0, %1 : vector<16x32xf32>
    %c0_1 = arith.constant 0 : index
    %c0_2 = arith.constant 0 : index
    %3 = vector.load %arg3[%c0_1, %c0_2] : memref<32x128xf32, #tpu.memory_space<vmem>>, vector<32x128xf32>
    %cst_3 = arith.constant dense<0.000000e+00> : vector<16x128xf32>
    %4 = tpu.matmul %2, %3, %cst_3 {dimension_numbers = #tpu.dot_dimension_numbers<[1], [0], [0], [1], [0, 0, 1, 1], [], []>, precision = #tpu.contract_precision<fp32>} : vector<16x32xf32>, vector<32x128xf32>, vector<16x128xf32> -> vector<16x128xf32>
    %c0_4 = arith.constant 0 : index
    %c0_5 = arith.constant 0 : index
    %5 = vector.load %arg4[%c0_4, %c0_5] : memref<1x128xf32, #tpu.memory_space<vmem>>, vector<1x128xf32>
    %6 = vector.broadcast %5 : vector<1x128xf32> to vector<16x128xf32>
    %7 = arith.addf %4, %6 : vector<16x128xf32>
    %cst_6 = arith.constant 1.000000e+00 : f32
    %8 = vector.broadcast %cst_6 : f32 to vector<16x128xf32>
    %9 = arith.addf %8, %7 : vector<16x128xf32>
    %c0_7 = arith.constant 0 : index
    %c0_8 = arith.constant 0 : index
    %10 = vector.load %arg1[%c0_7, %c0_8] : memref<16x128xf32, #tpu.memory_space<vmem>>, vector<16x128xf32>
    %11 = arith.mulf %10, %9 : vector<16x128xf32>
    %12 = arith.mulf %11, %11 : vector<16x128xf32>
    %cst_9 = arith.constant dense<0.000000e+00> : vector<16xf32>
    %13 = vector.multi_reduction <add>, %12, %cst_9 [1] : vector<16x128xf32> to vector<16xf32>
    %14 = vector.shape_cast %13 : vector<16xf32> to vector<16x1xf32>
    %cst_10 = arith.constant 9.99999974E-6 : f32
    %15 = vector.broadcast %cst_10 : f32 to vector<16x1xf32>
    %16 = arith.addf %14, %15 : vector<16x1xf32>
    %17 = math.rsqrt %16 : vector<16x1xf32>
    %18 = vector.broadcast %17 : vector<16x1xf32> to vector<16x128xf32>
    %19 = arith.mulf %11, %18 : vector<16x128xf32>
    %c0_11 = arith.constant 0 : index
    %c0_12 = arith.constant 0 : index
    %20 = vector.load %arg5[%c0_11, %c0_12] : memref<16x128xf32, #tpu.memory_space<vmem>>, vector<16x128xf32>
    tpu.vector_store %arg5[%c0_11, %c0_12], %19 {strides = array<i32>} : memref<16x128xf32, #tpu.memory_space<vmem>>, vector<16x128xf32>,
    return
  }
  func.func @transform_0(%arg0: i32) -> (i32, i32) {
    %c0_i32 = arith.constant 0 : i32
    %c0_i32_0 = arith.constant 0 : i32
    return %arg0, %c0_i32 : i32, i32
  }
  func.func @transform_1(%arg0: i32) -> (i32, i32) {
    %c0_i32 = arith.constant 0 : i32
    %c0_i32_0 = arith.constant 0 : i32
    return %arg0, %c0_i32 : i32, i32
  }
  func.func @transform_2(%arg0: i32) -> (i32, i32) {
    %c0_i32 = arith.constant 0 : i32
    %c0_i32_0 = arith.constant 0 : i32
    %c0_i32_1 = arith.constant 0 : i32
    return %c0_i32, %c0_i32_0 : i32, i32
  }
  func.func @transform_3(%arg0: i32) -> (i32, i32) {
    %c0_i32 = arith.constant 0 : i32
    %c0_i32_0 = arith.constant 0 : i32
    %c0_i32_1 = arith.constant 0 : i32
    return %c0_i32, %c0_i32_0 : i32, i32
  }
  func.func @transform_4(%arg0: i32) -> (i32, i32) {
    %c0_i32 = arith.constant 0 : i32
    %c0_i32_0 = arith.constant 0 : i32
    return %arg0, %c0_i32 : i32, i32
  }
}

</mosaic_0001>

<llo_original>
// kernel: tpu_custom_call.1
$region0: #{tpu_custom_call.1}
  #allocation0 [shape = 'u32[]', space=smem, size = 0x4, offset = 0x4, fixed_abs, tag = 'smem constant byte address 0x4 - core index']
  #allocation1 [shape = 'u32[144,128]{1,0:T(1,128)}', space=vmem, size = 0x12000, scoped, tag = 'internal scratch']
  %s0 = inlined_call_operand.hbm [shape: f32[16,128], index: 0, kind: input, shape index: {}]
  %s1 = inlined_call_operand.hbm [shape: f32[16,32], index: 1, kind: input, shape index: {}]
  %s2 = inlined_call_operand.hbm [shape: f32[32,128], index: 2, kind: input, shape index: {}]
  %s3 = inlined_call_operand.vmem [shape: f32[1,128], index: 3, kind: input, shape index: {}]
  %s4 = inlined_call_operand.hbm [shape: f32[16,128], index: 4, kind: output, shape index: {}]
  %s5 = sld [smem:[#allocation0]]
  $region38: #{tpu_custom_call.1} parent=0
    _
  %s7 = ssub.s32 1, %s5
  %s8 = scalar_select 0, %s7, %s5
  $region1: #{tpu_custom_call.1} parent=0
    #allocation2 [shape = 'u8[8192]{0}', space=vmem, size = 0x2000, scoped, tag = 'input window, operand 0, single buffered']
    #allocation3 [shape = 's32[1]{0}', space=sflag, size = 0x4, scoped, tag = 'scoped memory for tpu_custom_call.1']
    #allocation4 [shape = 's32[1]{0}', space=sflag, size = 0x4, scoped, tag = 'scoped memory for tpu_custom_call.1']
    #allocation5 [shape = 'u8[8192]{0}', space=vmem, size = 0x2000, scoped, tag = 'input window, operand 1, single buffered']
    #allocation6 [shape = 's32[1]{0}', space=sflag, size = 0x4, scoped, tag = 'scoped memory for tpu_custom_call.1']
    #allocation7 [shape = 'u8[16384]{0}', space=vmem, size = 0x4000, scoped, tag = 'input window, operand 2, single buffered']
    #allocation8 [shape = 'u8[8192]{0}', space=vmem, size = 0x2000, scoped, tag = 'output window, operand 0, single buffered']
    %9 = vsyncpa [#allocation3], 0
    %10 = vsyncpa [#allocation6], 0
    %11 = vsyncpa [#allocation4], 0
    // Predicated region
    $region2: #{tpu_custom_call.1} parent=1 // pred_check
      _
    $region3: #{tpu_custom_call.1} parent=1 // pred_check_branch
      %13 = sbr.rel (0) target = $region5
    $region4: #{tpu_custom_call.1} parent=1 // pred_region
      %s15 = ssub.s32 256, 256
      %16 = vsyncadd [#allocation3], %s15
      %s17 = sshll.u32 [#allocation2], 4
      %s18 = int_to_ptr.vmem [resolvable:$true] %s17
      %23 = dma.hbm_to_vmem [thread:$0]  %s0, 256, %s18, [#allocation3], 128, 128, 8
    $region5: #{tpu_custom_call.1} parent=1 // pred_fallthru
      _
    // Predicated region
    $region6: #{tpu_custom_call.1} parent=1 // pred_check
      _
    $region7: #{tpu_custom_call.1} parent=1 // pred_check_branch
      %25 = sbr.rel (0) target = $region9
    $region8: #{tpu_custom_call.1} parent=1 // pred_region
      %s27 = ssub.s32 256, 256
      %28 = vsyncadd [#allocation6], %s27
      %s29 = sshll.u32 [#allocation5], 4
      %s30 = int_to_ptr.vmem [resolvable:$true] %s29
      %35 = dma.hbm_to_vmem [thread:$0]  %s1, 256, %s30, [#allocation6], 128, 128, 8
    $region9: #{tpu_custom_call.1} parent=1 // pred_fallthru
      _
    // Predicated region
    $region10: #{tpu_custom_call.1} parent=1 // pred_check
      _
    $region11: #{tpu_custom_call.1} parent=1 // pred_check_branch
      %37 = sbr.rel (0) target = $region13
    $region12: #{tpu_custom_call.1} parent=1 // pred_region
      %s39 = ssub.s32 512, 512
      %40 = vsyncadd [#allocation6], %s39
      %s41 = sshll.u32 [#allocation7], 4
      %s42 = int_to_ptr.vmem [resolvable:$true] %s41
      %47 = dma.hbm_to_vmem [thread:$0]  %s2, 512, %s42, [#allocation6], 128, 128, 8
    $region13: #{tpu_custom_call.1} parent=1 // pred_fallthru
      _
    // Predicated region
    $region14: #{tpu_custom_call.1} parent=1 // pred_check
      _
    $region15: #{tpu_custom_call.1} parent=1 // pred_check_branch
      %49 = sbr.rel (0) target = $region17
    $region16: #{tpu_custom_call.1} parent=1 // pred_region
      _
    $region17: #{tpu_custom_call.1} parent=1 // pred_fallthru
      _
    // Predicated region
    $region18: #{tpu_custom_call.1} parent=1 // pred_check
      _
    $region19: #{tpu_custom_call.1} parent=1 // pred_check_branch
      %51 = sbr.rel (0) target = $region21
    $region20: #{tpu_custom_call.1} parent=1 // pred_region
      %52 = dma.done [#allocation3], 256
    $region21: #{tpu_custom_call.1} parent=1 // pred_fallthru
      _
    // Predicated region
    $region22: #{tpu_custom_call.1} parent=1 // pred_check
      _
    $region23: #{tpu_custom_call.1} parent=1 // pred_check_branch
      %54 = sbr.rel (0) target = $region25
    $region24: #{tpu_custom_call.1} parent=1 // pred_region
      %55 = dma.done [#allocation6], 256
    $region25: #{tpu_custom_call.1} parent=1 // pred_fallthru
      _
    // Predicated region
    $region26: #{tpu_custom_call.1} parent=1 // pred_check
      _
    $region27: #{tpu_custom_call.1} parent=1 // pred_check_branch
      %57 = sbr.rel (0) target = $region29
    $region28: #{tpu_custom_call.1} parent=1 // pred_region
      %58 = dma.done [#allocation6], 512
    $region29: #{tpu_custom_call.1} parent=1 // pred_fallthru
      _
    %v59 = vld [vmem:[#allocation5] sm:$0xff]
    %v60 = vld [vmem:[#allocation5 + $0x8] sm:$0xff]
    %v61 = vmul.f32 %v59, 0.25
    %v62 = vmul.f32 %v60, 0.25
    %v63 = vld [vmem:[#allocation7] sm:$0xff]
    %v64 = vld [vmem:[#allocation7 + $0x8] sm:$0xff]
    %v65 = vld [vmem:[#allocation7 + $0x10] sm:$0xff]
    %v66 = vld [vmem:[#allocation7 + $0x18] sm:$0xff]
    %v67 = vld [vmem:[%s3] sm:$0x1]
    %v69 = vlaneseq
    %v70 = vshrl.u32 %v69, 7
    %v71 = vsub.s32 0, %v70
    %v72 = vrot.slane %v67, %v71
    %vm74 = vcmask 261120
    %v76 = vsel %vm74, %v61, 0
    %v79 = vsel %vm74, %v62, 0
    %81 = vmatprep.subr.mxu0 0.0
    %v82 = vand.u32 %v63, 4294901760
    %83 = vmatpush1.msra.mxu0 %v82
    %84 = vmatprep.subr.mxu0 0.0
    %v85 = vand.u32 %v64, 4294901760
    %86 = vmatpush1.msra.mxu0 %v85
    %87 = vmatprep.subr.mxu0 0.0
    %v88 = vand.u32 %v65, 4294901760
    %89 = vmatpush1.msra.mxu0 %v88
    %90 = vmatprep.subr.mxu0 0.0
    %v91 = vand.u32 %v66, 4294901760
    %92 = vmatpush1.msra.mxu0 %v91
    %93 = vmatprep.subr.mxu0 0.0
    %94 = vmatpush1.msra.mxu0 0.0
    %95 = vmatprep.subr.mxu0 0.0
    %96 = vmatpush1.msra.mxu0 0.0
    %97 = vmatprep.subr.mxu0 0.0
    %98 = vmatpush1.msra.mxu0 0.0
    %99 = vmatprep.subr.mxu0 0.0
    %100 = vmatpush1.msra.mxu0 0.0
    %101 = vmatprep.subr.mxu0 0.0
    %102 = vmatpush1.msra.mxu0 0.0
    %103 = vmatprep.subr.mxu0 0.0
    %104 = vmatpush1.msra.mxu0 0.0
    %105 = vmatprep.subr.mxu0 0.0
    %106 = vmatpush1.msra.mxu0 0.0
    %107 = vmatprep.subr.mxu0 0.0
    %108 = vmatpush1.msra.mxu0 0.0
    %109 = vmatprep.subr.mxu0 0.0
    %110 = vmatpush1.msra.mxu0 0.0
    %111 = vmatprep.subr.mxu0 0.0
    %112 = vmatpush1.msra.mxu0 0.0
    %113 = vmatprep.subr.mxu0 0.0
    %114 = vmatpush1.msra.mxu0 0.0
    %115 = vmatprep.subr.mxu0 0.0
    %116 = vmatpush1.msra.mxu0 0.0
    %117 = vmatprep.subr.mxu0 0.0
    %118 = vmatpush1.msra.mxu0 0.0
    %119 = vmatprep.subr.mxu0 0.0
    %120 = vmatpush1.msra.mxu0 0.0
    %121 = vmatprep.subr.mxu0 0.0
    %122 = vmatpush1.msra.mxu0 0.0
    %123 = vmatprep.subr.mxu0 0.0
    %124 = vmatpush1.msra.mxu0 0.0
    %125 = vmatprep.subr.mxu0 0.0
    %126 = vmatpush1.msra.mxu0 0.0
    %127 = vmatprep.subr.mxu0 0.0
    %128 = vmatpush1.msra.mxu0 0.0
    %129 = vmatprep.subr.mxu0 0.0
    %130 = vmatpush1.msra.mxu0 0.0
    %131 = vmatprep.subr.mxu0 0.0
    %132 = vmatpush1.msra.mxu0 0.0
    %133 = vmatprep.subr.mxu0 0.0
    %134 = vmatpush1.msra.mxu0 0.0
    %135 = vmatprep.subr.mxu0 0.0
    %136 = vmatpush1.msra.mxu0 0.0
    %137 = vmatprep.subr.mxu0 0.0
    %138 = vmatpush1.msra.mxu0 0.0
    %139 = vmatprep.subr.mxu0 0.0
    %140 = vmatpush1.msra.mxu0 0.0
    %141 = vmatprep.subr.mxu0 0.0
    %142 = vmatpush1.msra.mxu0 0.0
    %143 = vmatprep.subr.mxu0 0.0
    %144 = vmatpush1.msra.mxu0 0.0
    %145 = vmatprep.subr.mxu0 0.0
    %146 = vmatpush1.msra.mxu0 0.0
    %147 = vmatprep.subr.mxu0 0.0
    %148 = vmatpush1.msra.mxu0 0.0
    %149 = vmatprep.mubr.f32.mxu0 0.0
    %v150 = vand.u32 %v76, 4294901760
    %v151 = vsub.f32 %v76, %v150
    %v152 = vand.u32 %v151, 4294901760
    %v153 = vsub.f32 %v151, %v152
    %v154 = vand.u32 %v153, 4294901760
    %155 = vmatmul.mubr.f32.gmra.mrb[0].mxu0 %v154
    %v156 = vpop.f32.mrb[0].mxu0
    %v157 = vadd.f32 %v72, %v156
    %v158 = vpop.f32.mrb[0].mxu0
    %159 = vmatprep.mubr.f32.mxu0 0.0
    %v160 = vand.u32 %v79, 4294901760
    %v161 = vsub.f32 %v79, %v160
    %v162 = vand.u32 %v161, 4294901760
    %v163 = vsub.f32 %v161, %v162
    %v164 = vand.u32 %v163, 4294901760
    %165 = vmatmul.mubr.f32.gmra.mrb[0].mxu0 %v164
    %v166 = vpop.f32.mrb[0].mxu0
    %v167 = vadd.f32 %v72, %v166
    %v168 = vpop.f32.mrb[0].mxu0
    %169 = vdwg.mxu0
    %170 = vmatprep.subr.mxu0 0.0
    %v171 = vand.u32 %v63, 4294901760
    %v172 = vsub.f32 %v63, %v171
    %v173 = vand.u32 %v172, 4294901760
    %v174 = vsub.f32 %v172, %v173
    %v175 = vand.u32 %v174, 4294901760
    %176 = vmatpush1.msra.mxu0 %v175
    %177 = vmatprep.subr.mxu0 0.0
    %v178 = vand.u32 %v64, 4294901760
    %v179 = vsub.f32 %v64, %v178
    %v180 = vand.u32 %v179, 4294901760
    %v181 = vsub.f32 %v179, %v180
    %v182 = vand.u32 %v181, 4294901760
    %183 = vmatpush1.msra.mxu0 %v182
    %184 = vmatprep.subr.mxu0 0.0
    %v185 = vand.u32 %v65, 4294901760
    %v186 = vsub.f32 %v65, %v185
    %v187 = vand.u32 %v186, 4294901760
    %v188 = vsub.f32 %v186, %v187
    %v189 = vand.u32 %v188, 4294901760
    %190 = vmatpush1.msra.mxu0 %v189
    %191 = vmatprep.subr.mxu0 0.0
    %v192 = vand.u32 %v66, 4294901760
    %v193 = vsub.f32 %v66, %v192
    %v194 = vand.u32 %v193, 4294901760
    %v195 = vsub.f32 %v193, %v194
    %v196 = vand.u32 %v195, 4294901760
    %197 = vmatpush1.msra.mxu0 %v196
    %198 = vmatprep.subr.mxu0 0.0
    %199 = vmatpush1.msra.mxu0 0.0
    %200 = vmatprep.subr.mxu0 0.0
    %201 = vmatpush1.msra.mxu0 0.0
    %202 = vmatprep.subr.mxu0 0.0
    %203 = vmatpush1.msra.mxu0 0.0
    %204 = vmatprep.subr.mxu0 0.0
    %205 = vmatpush1.msra.mxu0 0.0
    %206 = vmatprep.subr.mxu0 0.0
    %207 = vmatpush1.msra.mxu0 0.0
    %208 = vmatprep.subr.mxu0 0.0
    %209 = vmatpush1.msra.mxu0 0.0
    %210 = vmatprep.subr.mxu0 0.0
    %211 = vmatpush1.msra.mxu0 0.0
    %212 = vmatprep.subr.mxu0 0.0
    %213 = vmatpush1.msra.mxu0 0.0
    %214 = vmatprep.subr.mxu0 0.0
    %215 = vmatpush1.msra.mxu0 0.0
    %216 = vmatprep.subr.mxu0 0.0
    %217 = vmatpush1.msra.mxu0 0.0
    %218 = vmatprep.subr.mxu0 0.0
    %219 = vmatpush1.msra.mxu0 0.0
    %220 = vmatprep.subr.mxu0 0.0
    %221 = vmatpush1.msra.mxu0 0.0
    %222 = vmatprep.subr.mxu0 0.0
    %223 = vmatpush1.msra.mxu0 0.0
    %224 = vmatprep.subr.mxu0 0.0
    %225 = vmatpush1.msra.mxu0 0.0
    %226 = vmatprep.subr.mxu0 0.0
    %227 = vmatpush1.msra.mxu0 0.0
    %228 = vmatprep.subr.mxu0 0.0
    %229 = vmatpush1.msra.mxu0 0.0
    %230 = vmatprep.subr.mxu0 0.0
    %231 = vmatpush1.msra.mxu0 0.0
    %232 = vmatprep.subr.mxu0 0.0
    %233 = vmatpush1.msra.mxu0 0.0
    %234 = vmatprep.subr.mxu0 0.0
    %235 = vmatpush1.msra.mxu0 0.0
    %236 = vmatprep.subr.mxu0 0.0
    %237 = vmatpush1.msra.mxu0 0.0
    %238 = vmatprep.subr.mxu0 0.0
    %239 = vmatpush1.msra.mxu0 0.0
    %240 = vmatprep.subr.mxu0 0.0
    %241 = vmatpush1.msra.mxu0 0.0
    %242 = vmatprep.subr.mxu0 0.0
    %243 = vmatpush1.msra.mxu0 0.0
    %244 = vmatprep.subr.mxu0 0.0
    %245 = vmatpush1.msra.mxu0 0.0
    %246 = vmatprep.subr.mxu0 0.0
    %247 = vmatpush1.msra.mxu0 0.0
    %248 = vmatprep.subr.mxu0 0.0
    %249 = vmatpush1.msra.mxu0 0.0
    %250 = vmatprep.subr.mxu0 0.0
    %251 = vmatpush1.msra.mxu0 0.0
    %252 = vmatprep.subr.mxu0 0.0
    %253 = vmatpush1.msra.mxu0 0.0
    %254 = vmatprep.mubr.f32.mxu0 0.0
    %v255 = vand.u32 %v76, 4294901760
    %256 = vmatmul.mubr.f32.gmra.mrb[0].mxu0 %v255
    %v257 = vpop.f32.mrb[0].mxu0
    %v258 = vadd.f32 %v157, %v257
    %v259 = vpop.f32.mrb[0].mxu0
    %260 = vmatprep.mubr.f32.mxu0 0.0
    %v261 = vand.u32 %v79, 4294901760
    %262 = vmatmul.mubr.f32.gmra.mrb[0].mxu0 %v261
    %v263 = vpop.f32.mrb[0].mxu0
    %v264 = vadd.f32 %v167, %v263
    %v265 = vpop.f32.mrb[0].mxu0
    %266 = vdwg.mxu0
    %267 = vmatprep.subr.mxu0 0.0
    %v268 = vand.u32 %v63, 4294901760
    %v269 = vsub.f32 %v63, %v268
    %270 = vmatpush1.msra.mxu0 %v269
    %271 = vmatprep.subr.mxu0 0.0
    %v272 = vand.u32 %v64, 4294901760
    %v273 = vsub.f32 %v64, %v272
    %274 = vmatpush1.msra.mxu0 %v273
    %275 = vmatprep.subr.mxu0 0.0
    %v276 = vand.u32 %v65, 4294901760
    %v277 = vsub.f32 %v65, %v276
    %278 = vmatpush1.msra.mxu0 %v277
    %279 = vmatprep.subr.mxu0 0.0
    %v280 = vand.u32 %v66, 4294901760
    %v281 = vsub.f32 %v66, %v280
    %282 = vmatpush1.msra.mxu0 %v281
    %283 = vmatprep.subr.mxu0 0.0
    %284 = vmatpush1.msra.mxu0 0.0
    %285 = vmatprep.subr.mxu0 0.0
    %286 = vmatpush1.msra.mxu0 0.0
    %287 = vmatprep.subr.mxu0 0.0
    %288 = vmatpush1.msra.mxu0 0.0
    %289 = vmatprep.subr.mxu0 0.0
    %290 = vmatpush1.msra.mxu0 0.0
    %291 = vmatprep.subr.mxu0 0.0
    %292 = vmatpush1.msra.mxu0 0.0
    %293 = vmatprep.subr.mxu0 0.0
    %294 = vmatpush1.msra.mxu0 0.0
    %295 = vmatprep.subr.mxu0 0.0
    %296 = vmatpush1.msra.mxu0 0.0
    %297 = vmatprep.subr.mxu0 0.0
    %298 = vmatpush1.msra.mxu0 0.0
    %299 = vmatprep.subr.mxu0 0.0
    %300 = vmatpush1.msra.mxu0 0.0
    %301 = vmatprep.subr.mxu0 0.0
    %302 = vmatpush1.msra.mxu0 0.0
    %303 = vmatprep.subr.mxu0 0.0
    %304 = vmatpush1.msra.mxu0 0.0
    %305 = vmatprep.subr.mxu0 0.0
    %306 = vmatpush1.msra.mxu0 0.0
    %307 = vmatprep.subr.mxu0 0.0
    %308 = vmatpush1.msra.mxu0 0.0
    %309 = vmatprep.subr.mxu0 0.0
    %310 = vmatpush1.msra.mxu0 0.0
    %311 = vmatprep.subr.mxu0 0.0
    %312 = vmatpush1.msra.mxu0 0.0
    %313 = vmatprep.subr.mxu0 0.0
    %314 = vmatpush1.msra.mxu0 0.0
    %315 = vmatprep.subr.mxu0 0.0
    %316 = vmatpush1.msra.mxu0 0.0
    %317 = vmatprep.subr.mxu0 0.0
    %318 = vmatpush1.msra.mxu0 0.0
    %319 = vmatprep.subr.mxu0 0.0
    %320 = vmatpush1.msra.mxu0 0.0
    %321 = vmatprep.subr.mxu0 0.0
    %322 = vmatpush1.msra.mxu0 0.0
    %323 = vmatprep.subr.mxu0 0.0
    %324 = vmatpush1.msra.mxu0 0.0
    %325 = vmatprep.subr.mxu0 0.0
    %326 = vmatpush1.msra.mxu0 0.0
    %327 = vmatprep.subr.mxu0 0.0
    %328 = vmatpush1.msra.mxu0 0.0
    %329 = vmatprep.subr.mxu0 0.0
    %330 = vmatpush1.msra.mxu0 0.0
    %331 = vmatprep.subr.mxu0 0.0
    %332 = vmatpush1.msra.mxu0 0.0
    %333 = vmatprep.subr.mxu0 0.0
    %334 = vmatpush1.msra.mxu0 0.0
    %335 = vmatprep.subr.mxu0 0.0
    %336 = vmatpush1.msra.mxu0 0.0
    %337 = vmatprep.subr.mxu0 0.0
    %338 = vmatpush1.msra.mxu0 0.0
    %339 = vmatprep.mubr.f32.mxu0 0.0
    %v340 = vand.u32 %v76, 4294901760
    %v341 = vsub.f32 %v76, %v340
    %342 = vmatmul.mubr.f32.gmra.mrb[0].mxu0 %v341
    %v343 = vpop.f32.mrb[0].mxu0
    %v344 = vadd.f32 %v258, %v343
    %v345 = vpop.f32.mrb[0].mxu0
    %346 = vmatprep.mubr.f32.mxu0 0.0
    %v347 = vand.u32 %v79, 4294901760
    %v348 = vsub.f32 %v79, %v347
    %349 = vmatmul.mubr.f32.gmra.mrb[0].mxu0 %v348
    %v350 = vpop.f32.mrb[0].mxu0
    %v351 = vadd.f32 %v264, %v350
    %v352 = vpop.f32.mrb[0].mxu0
    %353 = vdwg.mxu0
    %354 = vmatprep.subr.mxu0 0.0
    %v355 = vand.u32 %v63, 4294901760
    %356 = vmatpush1.msra.mxu0 %v355
    %357 = vmatprep.subr.mxu0 0.0
    %v358 = vand.u32 %v64, 4294901760
    %359 = vmatpush1.msra.mxu0 %v358
    %360 = vmatprep.subr.mxu0 0.0
    %v361 = vand.u32 %v65, 4294901760
    %362 = vmatpush1.msra.mxu0 %v361
    %363 = vmatprep.subr.mxu0 0.0
    %v364 = vand.u32 %v66, 4294901760
    %365 = vmatpush1.msra.mxu0 %v364
    %366 = vmatprep.subr.mxu0 0.0
    %367 = vmatpush1.msra.mxu0 0.0
    %368 = vmatprep.subr.mxu0 0.0
    %369 = vmatpush1.msra.mxu0 0.0
    %370 = vmatprep.subr.mxu0 0.0
    %371 = vmatpush1.msra.mxu0 0.0
    %372 = vmatprep.subr.mxu0 0.0
    %373 = vmatpush1.msra.mxu0 0.0
    %374 = vmatprep.subr.mxu0 0.0
    %375 = vmatpush1.msra.mxu0 0.0
    %376 = vmatprep.subr.mxu0 0.0
    %377 = vmatpush1.msra.mxu0 0.0
    %378 = vmatprep.subr.mxu0 0.0
    %379 = vmatpush1.msra.mxu0 0.0
    %380 = vmatprep.subr.mxu0 0.0
    %381 = vmatpush1.msra.mxu0 0.0
    %382 = vmatprep.subr.mxu0 0.0
    %383 = vmatpush1.msra.mxu0 0.0
    %384 = vmatprep.subr.mxu0 0.0
    %385 = vmatpush1.msra.mxu0 0.0
    %386 = vmatprep.subr.mxu0 0.0
    %387 = vmatpush1.msra.mxu0 0.0
    %388 = vmatprep.subr.mxu0 0.0
    %389 = vmatpush1.msra.mxu0 0.0
    %390 = vmatprep.subr.mxu0 0.0
    %391 = vmatpush1.msra.mxu0 0.0
    %392 = vmatprep.subr.mxu0 0.0
    %393 = vmatpush1.msra.mxu0 0.0
    %394 = vmatprep.subr.mxu0 0.0
    %395 = vmatpush1.msra.mxu0 0.0
    %396 = vmatprep.subr.mxu0 0.0
    %397 = vmatpush1.msra.mxu0 0.0
    %398 = vmatprep.subr.mxu0 0.0
    %399 = vmatpush1.msra.mxu0 0.0
    %400 = vmatprep.subr.mxu0 0.0
    %401 = vmatpush1.msra.mxu0 0.0
    %402 = vmatprep.subr.mxu0 0.0
    %403 = vmatpush1.msra.mxu0 0.0
    %404 = vmatprep.subr.mxu0 0.0
    %405 = vmatpush1.msra.mxu0 0.0
    %406 = vmatprep.subr.mxu0 0.0
    %407 = vmatpush1.msra.mxu0 0.0
    %408 = vmatprep.subr.mxu0 0.0
    %409 = vmatpush1.msra.mxu0 0.0
    %410 = vmatprep.subr.mxu0 0.0
    %411 = vmatpush1.msra.mxu0 0.0
    %412 = vmatprep.subr.mxu0 0.0
    %413 = vmatpush1.msra.mxu0 0.0
    %414 = vmatprep.subr.mxu0 0.0
    %415 = vmatpush1.msra.mxu0 0.0
    %416 = vmatprep.subr.mxu0 0.0
    %417 = vmatpush1.msra.mxu0 0.0
    %418 = vmatprep.subr.mxu0 0.0
    %419 = vmatpush1.msra.mxu0 0.0
    %420 = vmatprep.subr.mxu0 0.0
    %421 = vmatpush1.msra.mxu0 0.0
    %422 = vmatprep.mubr.f32.mxu0 0.0
    %v423 = vand.u32 %v76, 4294901760
    %v424 = vsub.f32 %v76, %v423
    %v425 = vand.u32 %v424, 4294901760
    %426 = vmatmul.mubr.f32.gmra.mrb[0].mxu0 %v425
    %v427 = vpop.f32.mrb[0].mxu0
    %v428 = vadd.f32 %v344, %v427
    %v429 = vpop.f32.mrb[0].mxu0
    %430 = vmatprep.mubr.f32.mxu0 0.0
    %v431 = vand.u32 %v79, 4294901760
    %v432 = vsub.f32 %v79, %v431
    %v433 = vand.u32 %v432, 4294901760
    %434 = vmatmul.mubr.f32.gmra.mrb[0].mxu0 %v433
    %v435 = vpop.f32.mrb[0].mxu0
    %v436 = vadd.f32 %v351, %v435
    %v437 = vpop.f32.mrb[0].mxu0
    %438 = vdwg.mxu0
    %439 = vmatprep.subr.mxu0 0.0
    %v440 = vand.u32 %v63, 4294901760
    %v441 = vsub.f32 %v63, %v440
    %v442 = vand.u32 %v441, 4294901760
    %443 = vmatpush1.msra.mxu0 %v442
    %444 = vmatprep.subr.mxu0 0.0
    %v445 = vand.u32 %v64, 4294901760
    %v446 = vsub.f32 %v64, %v445
    %v447 = vand.u32 %v446, 4294901760
    %448 = vmatpush1.msra.mxu0 %v447
    %449 = vmatprep.subr.mxu0 0.0
    %v450 = vand.u32 %v65, 4294901760
    %v451 = vsub.f32 %v65, %v450
    %v452 = vand.u32 %v451, 4294901760
    %453 = vmatpush1.msra.mxu0 %v452
    %454 = vmatprep.subr.mxu0 0.0
    %v455 = vand.u32 %v66, 4294901760
    %v456 = vsub.f32 %v66, %v455
    %v457 = vand.u32 %v456, 4294901760
    %458 = vmatpush1.msra.mxu0 %v457
    %459 = vmatprep.subr.mxu0 0.0
    %460 = vmatpush1.msra.mxu0 0.0
    %461 = vmatprep.subr.mxu0 0.0
    %462 = vmatpush1.msra.mxu0 0.0
    %463 = vmatprep.subr.mxu0 0.0
    %464 = vmatpush1.msra.mxu0 0.0
    %465 = vmatprep.subr.mxu0 0.0
    %466 = vmatpush1.msra.mxu0 0.0
    %467 = vmatprep.subr.mxu0 0.0
    %468 = vmatpush1.msra.mxu0 0.0
    %469 = vmatprep.subr.mxu0 0.0
    %470 = vmatpush1.msra.mxu0 0.0
    %471 = vmatprep.subr.mxu0 0.0
    %472 = vmatpush1.msra.mxu0 0.0
    %473 = vmatprep.subr.mxu0 0.0
    %474 = vmatpush1.msra.mxu0 0.0
    %475 = vmatprep.subr.mxu0 0.0
    %476 = vmatpush1.msra.mxu0 0.0
    %477 = vmatprep.subr.mxu0 0.0
    %478 = vmatpush1.msra.mxu0 0.0
    %479 = vmatprep.subr.mxu0 0.0
    %480 = vmatpush1.msra.mxu0 0.0
    %481 = vmatprep.subr.mxu0 0.0
    %482 = vmatpush1.msra.mxu0 0.0
    %483 = vmatprep.subr.mxu0 0.0
    %484 = vmatpush1.msra.mxu0 0.0
    %485 = vmatprep.subr.mxu0 0.0
    %486 = vmatpush1.msra.mxu0 0.0
    %487 = vmatprep.subr.mxu0 0.0
    %488 = vmatpush1.msra.mxu0 0.0
    %489 = vmatprep.subr.mxu0 0.0
    %490 = vmatpush1.msra.mxu0 0.0
    %491 = vmatprep.subr.mxu0 0.0
    %492 = vmatpush1.msra.mxu0 0.0
    %493 = vmatprep.subr.mxu0 0.0
    %494 = vmatpush1.msra.mxu0 0.0
    %495 = vmatprep.subr.mxu0 0.0
    %496 = vmatpush1.msra.mxu0 0.0
    %497 = vmatprep.subr.mxu0 0.0
    %498 = vmatpush1.msra.mxu0 0.0
    %499 = vmatprep.subr.mxu0 0.0
    %500 = vmatpush1.msra.mxu0 0.0
    %501 = vmatprep.subr.mxu0 0.0
    %502 = vmatpush1.msra.mxu0 0.0
    %503 = vmatprep.subr.mxu0 0.0
    %504 = vmatpush1.msra.mxu0 0.0
    %505 = vmatprep.subr.mxu0 0.0
    %506 = vmatpush1.msra.mxu0 0.0
    %507 = vmatprep.subr.mxu0 0.0
    %508 = vmatpush1.msra.mxu0 0.0
    %509 = vmatprep.subr.mxu0 0.0
    %510 = vmatpush1.msra.mxu0 0.0
    %511 = vmatprep.subr.mxu0 0.0
    %512 = vmatpush1.msra.mxu0 0.0
    %513 = vmatprep.subr.mxu0 0.0
    %514 = vmatpush1.msra.mxu0 0.0
    %515 = vmatprep.mubr.f32.mxu0 0.0
    %v516 = vand.u32 %v76, 4294901760
    %517 = vmatmul.mubr.f32.gmra.mrb[0].mxu0 %v516
    %v518 = vpop.f32.mrb[0].mxu0
    %v519 = vadd.f32 %v428, %v518
    %v520 = vpop.f32.mrb[0].mxu0
    %521 = vmatprep.mubr.f32.mxu0 0.0
    %v522 = vand.u32 %v79, 4294901760
    %523 = vmatmul.mubr.f32.gmra.mrb[0].mxu0 %v522
    %v524 = vpop.f32.mrb[0].mxu0
    %v525 = vadd.f32 %v436, %v524
    %v526 = vpop.f32.mrb[0].mxu0
    %527 = vdwg.mxu0
    %528 = vmatprep.subr.mxu0 0.0
    %v529 = vand.u32 %v63, 4294901760
    %530 = vmatpush1.msra.mxu0 %v529
    %531 = vmatprep.subr.mxu0 0.0
    %v532 = vand.u32 %v64, 4294901760
    %533 = vmatpush1.msra.mxu0 %v532
    %534 = vmatprep.subr.mxu0 0.0
    %v535 = vand.u32 %v65, 4294901760
    %536 = vmatpush1.msra.mxu0 %v535
    %537 = vmatprep.subr.mxu0 0.0
    %v538 = vand.u32 %v66, 4294901760
    %539 = vmatpush1.msra.mxu0 %v538
    %540 = vmatprep.subr.mxu0 0.0
    %541 = vmatpush1.msra.mxu0 0.0
    %542 = vmatprep.subr.mxu0 0.0
    %543 = vmatpush1.msra.mxu0 0.0
    %544 = vmatprep.subr.mxu0 0.0
    %545 = vmatpush1.msra.mxu0 0.0
    %546 = vmatprep.subr.mxu0 0.0
    %547 = vmatpush1.msra.mxu0 0.0
    %548 = vmatprep.subr.mxu0 0.0
    %549 = vmatpush1.msra.mxu0 0.0
    %550 = vmatprep.subr.mxu0 0.0
    %551 = vmatpush1.msra.mxu0 0.0
    %552 = vmatprep.subr.mxu0 0.0
    %553 = vmatpush1.msra.mxu0 0.0
    %554 = vmatprep.subr.mxu0 0.0
    %555 = vmatpush1.msra.mxu0 0.0
    %556 = vmatprep.subr.mxu0 0.0
    %557 = vmatpush1.msra.mxu0 0.0
    %558 = vmatprep.subr.mxu0 0.0
    %559 = vmatpush1.msra.mxu0 0.0
    %560 = vmatprep.subr.mxu0 0.0
    %561 = vmatpush1.msra.mxu0 0.0
    %562 = vmatprep.subr.mxu0 0.0
    %563 = vmatpush1.msra.mxu0 0.0
    %564 = vmatprep.subr.mxu0 0.0
    %565 = vmatpush1.msra.mxu0 0.0
    %566 = vmatprep.subr.mxu0 0.0
    %567 = vmatpush1.msra.mxu0 0.0
    %568 = vmatprep.subr.mxu0 0.0
    %569 = vmatpush1.msra.mxu0 0.0
    %570 = vmatprep.subr.mxu0 0.0
    %571 = vmatpush1.msra.mxu0 0.0
    %572 = vmatprep.subr.mxu0 0.0
    %573 = vmatpush1.msra.mxu0 0.0
    %574 = vmatprep.subr.mxu0 0.0
    %575 = vmatpush1.msra.mxu0 0.0
    %576 = vmatprep.subr.mxu0 0.0
    %577 = vmatpush1.msra.mxu0 0.0
    %578 = vmatprep.subr.mxu0 0.0
    %579 = vmatpush1.msra.mxu0 0.0
    %580 = vmatprep.subr.mxu0 0.0
    %581 = vmatpush1.msra.mxu0 0.0
    %582 = vmatprep.subr.mxu0 0.0
    %583 = vmatpush1.msra.mxu0 0.0
    %584 = vmatprep.subr.mxu0 0.0
    %585 = vmatpush1.msra.mxu0 0.0
    %586 = vmatprep.subr.mxu0 0.0
    %587 = vmatpush1.msra.mxu0 0.0
    %588 = vmatprep.subr.mxu0 0.0
    %589 = vmatpush1.msra.mxu0 0.0
    %590 = vmatprep.subr.mxu0 0.0
    %591 = vmatpush1.msra.mxu0 0.0
    %592 = vmatprep.subr.mxu0 0.0
    %593 = vmatpush1.msra.mxu0 0.0
    %594 = vmatprep.subr.mxu0 0.0
    %595 = vmatpush1.msra.mxu0 0.0
    %596 = vmatprep.mubr.f32.mxu0 0.0
    %v597 = vand.u32 %v76, 4294901760
    %598 = vmatmul.mubr.f32.gmra.mrb[0].mxu0 %v597
    %v599 = vpop.f32.mrb[0].mxu0
    %v600 = vadd.f32 %v519, %v599
    %v601 = vpop.f32.mrb[0].mxu0
    %602 = vmatprep.mubr.f32.mxu0 0.0
    %v603 = vand.u32 %v79, 4294901760
    %604 = vmatmul.mubr.f32.gmra.mrb[0].mxu0 %v603
    %v605 = vpop.f32.mrb[0].mxu0
    %v606 = vadd.f32 %v525, %v605
    %v607 = vpop.f32.mrb[0].mxu0
    %608 = vdwg.mxu0
    %v609 = vadd.f32 %v600, 1.0
    %v610 = vadd.f32 %v606, 1.0
    %v611 = vld [vmem:[#allocation2] sm:$0xff]
    %v612 = vld [vmem:[#allocation2 + $0x8] sm:$0xff]
    %v613 = vmul.f32 %v611, %v609
    %v614 = vmul.f32 %v612, %v610
    %v615 = vmul.f32 %v613, %v613
    %v616 = vmul.f32 %v614, %v614
    %617 = vadd.xlane.f32.xlu0 %v615
    %v618 = vpop.xlane.xlu0 %617
    %619 = vadd.xlane.f32.xlu0 %v616
    %v620 = vpop.xlane.xlu0 %619
    %v621 = vadd.f32 %v618, 1e-05
    %v622 = vadd.f32 %v620, 1e-05
    %v623 = vrsqrt.pop %v621
    %v624 = vrsqrt.pop %v622
    %v625 = vmul.f32 %v613, %v623
    %v626 = vmul.f32 %v614, %v624
    %627 = vst [vmem:[#allocation8] sm:$0xff] %v625
    %628 = vst [vmem:[#allocation8 + $0x8] sm:$0xff] %v626
    // Predicated region
    $region30: #{tpu_custom_call.1} parent=1 // pred_check
      _
    $region31: #{tpu_custom_call.1} parent=1 // pred_check_branch
      %630 = sbr.rel (0) target = $region33
    $region32: #{tpu_custom_call.1} parent=1 // pred_region
      %s632 = ssub.s32 256, 256
      %633 = vsyncadd [#allocation4], %s632
      %s634 = sshll.u32 [#allocation8], 4
      %s635 = int_to_ptr.vmem [resolvable:$true] %s634
      %640 = dma.vmem_to_hbm [thread:$0]  %s635, 256, %s4, [#allocation4], 128, 128, 8
    $region33: #{tpu_custom_call.1} parent=1 // pred_fallthru
      _
    // Predicated region
    $region34: #{tpu_custom_call.1} parent=1 // pred_check
      _
    $region35: #{tpu_custom_call.1} parent=1 // pred_check_branch
      %642 = sbr.rel (0) target = $region37
    $region36: #{tpu_custom_call.1} parent=1 // pred_region
      %643 = dma.done [#allocation4], 256
    $region37: #{tpu_custom_call.1} parent=1 // pred_fallthru
      _
    %644 = vsyncpa [#allocation3], 1
    %645 = vsyncpa [#allocation6], 1
    %646 = vsyncpa [#allocation4], 1

</llo_original>
